<compile_context>
chip_gen: v7x
topology: tpu7x:2x2x1
jax: 0.10.0
libtpu: 0.0.40
codegen_flags: <defaults>
</compile_context>

<pallas_src>
import jax
import jax.numpy as jnp
import numpy as np
from jax.experimental import pallas as pl
from jax.experimental.pallas import tpu as pltpu

_C = 256          # spatial width per channel (lanes)
_KIN = 6          # input channels
_KOUT = 2         # output channels
_F = _KIN * _C    # 1536
_FOUT = _KOUT * _C  # 512


def _round_up(a, b):
    return ((a + b - 1) // b) * b


def _fused_affine_kernel(x_ref, w_ref, b_ref, o_ref):
    """x_ref: (TM, 1536) VMEM ; w_ref: (12,) SMEM ; b_ref: (2,) SMEM ; o_ref: (TM, 512) VMEM."""
    f32 = jnp.float32
    # Hoist the 12 weight / 2 bias scalar reads (SMEM) once per grid step.
    w = [[w_ref[c * _KIN + k] for k in range(_KIN)] for c in range(_KOUT)]
    b = [b_ref[c] for c in range(_KOUT)]

    # Load each 128-aligned channel slice once; use it for both output
    # channels.  Pairwise grouping keeps the add chain shallow and the number
    # of simultaneously-live (TM, 256) temporaries small.
    acc = [None] * _KOUT
    for k in range(0, _KIN, 2):
        ca = x_ref[:, k * _C:(k + 1) * _C].astype(f32)
        cb = x_ref[:, (k + 1) * _C:(k + 2) * _C].astype(f32)
        for c in range(_KOUT):
            pair = ca * w[c][k] + cb * w[c][k + 1]
            acc[c] = pair if acc[c] is None else acc[c] + pair
    for c in range(_KOUT):
        o_ref[:, c * _C:(c + 1) * _C] = (acc[c] + b[c]).astype(o_ref.dtype)


def _compose_affine(hidden_ws, hidden_bs, wf, bf):
    """Fold the (optional) 6->6 chain and the final 6->2 into one affine map."""
    if hidden_ws is None:
        return wf, bf
    W = jnp.eye(_KIN, dtype=jnp.float32)
    b = jnp.zeros((_KIN,), dtype=jnp.float32)
    for l in range(hidden_ws.shape[0]):
        W = hidden_ws[l] @ W
        b = hidden_ws[l] @ b + hidden_bs[l]
    return wf @ W, wf @ b + bf


def _vmem_cap_bytes():
    """Device-derived usable-VMEM cap (leave room for compiler scratch)."""
    try:
        info = pltpu.get_tpu_info()
        cap = int(getattr(info, "vmem_capacity_bytes", 64 << 20))
    except Exception:
        cap = 64 << 20  # conservative (v7x-sized) fallback
    return max(32 << 20, cap - (16 << 20))


def mlp_fusion_forward(x, hidden_ws, hidden_bs, wf, bf, *, tm=2048, out_dtype=None):
    """x: (B, N, 1536) -> (B, N, 2, 256, 1, 1)."""
    B, N, F = x.shape
    assert F == _F
    M = B * N
    out_dtype = x.dtype if out_dtype is None else jnp.dtype(out_dtype)

    # Pre-compose the activation-free linear chain into a single 6->2 map.
    W_eff, b_eff = _compose_affine(hidden_ws, hidden_bs, wf, bf)
    w_flat = W_eff.reshape(-1).astype(jnp.float32)   # (12,)
    b_flat = b_eff.astype(jnp.float32)               # (2,)

    x_rows = x.reshape(M, F)  # no pad: Pallas handles the partial last block.

    # --- Row-tile selection -------------------------------------------------
    # Megacore: ensure >= 2 grid steps whenever M is large enough to split,
    # so dimension_semantics=("parallel",) can shard across 2 TensorCores.
    if M <= 2 * tm:
        tm_eff = min(tm, max(8, _round_up(pl.cdiv(M, 2), 8)))
    else:
        tm_eff = tm
    tm_eff = min(tm_eff, max(8, _round_up(M, 8)))

    # Fit double-buffered (in + out) blocks under the device VMEM cap.
    in_item = np.dtype(x.dtype).itemsize
    out_item = np.dtype(out_dtype).itemsize
    cap = _vmem_cap_bytes()

    def _blocks_bytes(t):
        return 2 * t * (F * in_item + _FOUT * out_item)

    while tm_eff > 8 and _blocks_bytes(tm_eff) + (4 << 20) > cap:
        tm_eff = max(8, _round_up(tm_eff // 2, 8))

    vmem_bytes = int(min(cap, max(32 << 20, _blocks_bytes(tm_eff) + (8 << 20))))

    grid = (pl.cdiv(M, tm_eff),)

    out = pl.pallas_call(
        _fused_affine_kernel,
        out_shape=jax.ShapeDtypeStruct((M, _FOUT), out_dtype),
        grid_spec=pltpu.PrefetchScalarGridSpec(
            num_scalar_prefetch=0,
            grid=grid,
            in_specs=[
                pl.BlockSpec((tm_eff, F), lambda i: (i, 0)),
                pl.BlockSpec(memory_space=pltpu.SMEM),
                pl.BlockSpec(memory_space=pltpu.SMEM),
            ],
            out_specs=pl.BlockSpec((tm_eff, _FOUT), lambda i: (i, 0)),
        ),
        compiler_params=pltpu.CompilerParams(
            dimension_semantics=("parallel",),
            vmem_limit_bytes=vmem_bytes,
        ),
    )(x_rows, w_flat, b_flat)

    # (M, 512) rows are laid out as [c0 | c1] per row -> (B, N, 2, 256, 1, 1).
    return out.reshape(B, N, _KOUT, _C, 1, 1)


def mlp_fusion_reference(x, hidden_ws, hidden_bs, wf, bf):
    """Pure-JAX reference mirroring the PyTorch forward exactly."""
    B, N, _ = x.shape
    h = x.astype(jnp.float32).reshape(B, N, _KIN, _C).transpose(0, 1, 3, 2)  # (B,N,256,6)
    if hidden_ws is not None:
        for l in range(hidden_ws.shape[0]):
            h = h @ hidden_ws[l].T + hidden_bs[l]
    h = h @ wf.T + bf                                                        # (B,N,256,2)
    return h.transpose(0, 1, 3, 2).reshape(B, N, _KOUT, _C, 1, 1)


def init_params(key, num_hidden_layers):
    """Deterministic init mimicking nn.Linear's U(-1/sqrt(in), 1/sqrt(in))."""
    ks = jax.random.split(key, 2 * num_hidden_layers + 2)
    bound6 = 1.0 / np.sqrt(6.0)
    hidden_ws = hidden_bs = None
    if num_hidden_layers > 0:
        hidden_ws = jnp.stack([
            jax.random.uniform(ks[2 * i], (6, 6), jnp.float32, -bound6, bound6)
            for i in range(num_hidden_layers)])
        hidden_bs = jnp.stack([
            jax.random.uniform(ks[2 * i + 1], (6,), jnp.float32, -bound6, bound6)
            for i in range(num_hidden_layers)])
    wf = jax.random.uniform(ks[-2], (2, 6), jnp.float32, -bound6, bound6)
    bf = jax.random.uniform(ks[-1], (2,), jnp.float32, -bound6, bound6)
    return hidden_ws, hidden_bs, wf, bf


if __name__ == "__main__":
    key = jax.random.PRNGKey(0)
    kx, kx2, kp0, kp1, kp2 = jax.random.split(key, 5)

    # Case 1: MLPFusion(layer=0) — just the final Linear(6, 2).
    B, N = 2, 4
    x = jax.random.normal(kx, (B, N, _F), dtype=jnp.float32)
    hidden_ws, hidden_bs, wf, bf = init_params(kp0, 0)
    out0 = jax.block_until_ready(mlp_fusion_forward(x, hidden_ws, hidden_bs, wf, bf))
    ref0 = mlp_fusion_reference(x, hidden_ws, hidden_bs, wf, bf)
    assert out0.shape == (B, N, 2, 256, 1, 1), out0.shape
    np.testing.assert_allclose(np.asarray(out0), np.asarray(ref0), rtol=1e-5, atol=1e-5)

    # Case 2: MLPFusion(layer=2) — hidden 6->6 layers pre-composed in the wrapper.
    hidden_ws, hidden_bs, wf, bf = init_params(kp2, 2)
    out2 = jax.block_until_ready(mlp_fusion_forward(x, hidden_ws, hidden_bs, wf, bf))
    ref2 = mlp_fusion_reference(x, hidden_ws, hidden_bs, wf, bf)
    np.testing.assert_allclose(np.asarray(out2), np.asarray(ref2), rtol=1e-5, atol=1e-5)

    # Case 3: ragged M (B*N not a multiple of the tile) — exercises the
    # cdiv grid + partial last block path (no host-side pad / slice).
    B3, N3 = 3, 7
    x3 = jax.random.normal(kx2, (B3, N3, _F), dtype=jnp.float32)
    hidden_ws, hidden_bs, wf, bf = init_params(kp1, 1)
    out3 = jax.block_until_ready(mlp_fusion_forward(x3, hidden_ws, hidden_bs, wf, bf))
    ref3 = mlp_fusion_reference(x3, hidden_ws, hidden_bs, wf, bf)
    np.testing.assert_allclose(np.asarray(out3), np.asarray(ref3), rtol=1e-5, atol=1e-5)

    # Case 4: bf16 in / bf16 out (bandwidth option) — loose tolerance.
    x_bf = x.astype(jnp.bfloat16)
    out4 = jax.block_until_ready(
        mlp_fusion_forward(x_bf, hidden_ws, hidden_bs, wf, bf, out_dtype=jnp.bfloat16))
    ref4 = mlp_fusion_reference(x_bf, hidden_ws, hidden_bs, wf, bf)
    np.testing.assert_allclose(np.asarray(out4, dtype=np.float32),
                               np.asarray(ref4, dtype=np.float32), rtol=5e-2, atol=5e-2)

    print("KERNEL_OK")
</pallas_src>

<mosaic_0001>
module attributes {stable_mosaic.version = 11 : i64} {
  func.func @_fused_affine_kernel(%arg0: i32, %arg1: memref<8x1536xf32, #tpu.memory_space<vmem>>, %arg2: memref<12xf32, #tpu.memory_space<smem>>, %arg3: memref<2xf32, #tpu.memory_space<smem>>, %arg4: memref<8x512xf32, #tpu.memory_space<vmem>>) attributes {dimension_semantics = [#tpu.dimension_semantics<parallel>], iteration_bounds = array<i64: 1>, scalar_prefetch = 0 : i64, scratch_operands = 0 : i64, tpu.core_type = #tpu.core_type<tc>, window_params = [{transform_indices = @transform_0, window_bounds = array<i64: 8, 1536>}, {transform_indices = @transform_1, window_bounds = array<i64: 12>}, {transform_indices = @transform_2, window_bounds = array<i64: 2>}, {transform_indices = @transform_3, window_bounds = array<i64: 8, 512>}]} {
    %c0 = arith.constant 0 : index
    %0 = memref.load %arg2[%c0] : memref<12xf32, #tpu.memory_space<smem>>
    %c1 = arith.constant 1 : index
    %1 = memref.load %arg2[%c1] : memref<12xf32, #tpu.memory_space<smem>>
    %c2 = arith.constant 2 : index
    %2 = memref.load %arg2[%c2] : memref<12xf32, #tpu.memory_space<smem>>
    %c3 = arith.constant 3 : index
    %3 = memref.load %arg2[%c3] : memref<12xf32, #tpu.memory_space<smem>>
    %c4 = arith.constant 4 : index
    %4 = memref.load %arg2[%c4] : memref<12xf32, #tpu.memory_space<smem>>
    %c5 = arith.constant 5 : index
    %5 = memref.load %arg2[%c5] : memref<12xf32, #tpu.memory_space<smem>>
    %c6 = arith.constant 6 : index
    %6 = memref.load %arg2[%c6] : memref<12xf32, #tpu.memory_space<smem>>
    %c7 = arith.constant 7 : index
    %7 = memref.load %arg2[%c7] : memref<12xf32, #tpu.memory_space<smem>>
    %c8 = arith.constant 8 : index
    %8 = memref.load %arg2[%c8] : memref<12xf32, #tpu.memory_space<smem>>
    %c9 = arith.constant 9 : index
    %9 = memref.load %arg2[%c9] : memref<12xf32, #tpu.memory_space<smem>>
    %c10 = arith.constant 10 : index
    %10 = memref.load %arg2[%c10] : memref<12xf32, #tpu.memory_space<smem>>
    %c11 = arith.constant 11 : index
    %11 = memref.load %arg2[%c11] : memref<12xf32, #tpu.memory_space<smem>>
    %c0_0 = arith.constant 0 : index
    %12 = memref.load %arg3[%c0_0] : memref<2xf32, #tpu.memory_space<smem>>
    %c1_1 = arith.constant 1 : index
    %13 = memref.load %arg3[%c1_1] : memref<2xf32, #tpu.memory_space<smem>>
    %c0_2 = arith.constant 0 : index
    %c0_3 = arith.constant 0 : index
    %14 = vector.load %arg1[%c0_2, %c0_3] : memref<8x1536xf32, #tpu.memory_space<vmem>>, vector<8x256xf32>
    %c0_4 = arith.constant 0 : index
    %c256 = arith.constant 256 : index
    %15 = vector.load %arg1[%c0_4, %c256] : memref<8x1536xf32, #tpu.memory_space<vmem>>, vector<8x256xf32>
    %16 = vector.broadcast %0 : f32 to vector<8x256xf32>
    %17 = arith.mulf %14, %16 : vector<8x256xf32>
    %18 = vector.broadcast %1 : f32 to vector<8x256xf32>
    %19 = arith.mulf %15, %18 : vector<8x256xf32>
    %20 = arith.addf %17, %19 : vector<8x256xf32>
    %21 = vector.broadcast %6 : f32 to vector<8x256xf32>
    %22 = arith.mulf %14, %21 : vector<8x256xf32>
    %23 = vector.broadcast %7 : f32 to vector<8x256xf32>
    %24 = arith.mulf %15, %23 : vector<8x256xf32>
    %25 = arith.addf %22, %24 : vector<8x256xf32>
    %c0_5 = arith.constant 0 : index
    %c512 = arith.constant 512 : index
    %26 = vector.load %arg1[%c0_5, %c512] : memref<8x1536xf32, #tpu.memory_space<vmem>>, vector<8x256xf32>
    %c0_6 = arith.constant 0 : index
    %c768 = arith.constant 768 : index
    %27 = vector.load %arg1[%c0_6, %c768] : memref<8x1536xf32, #tpu.memory_space<vmem>>, vector<8x256xf32>
    %28 = vector.broadcast %2 : f32 to vector<8x256xf32>
    %29 = arith.mulf %26, %28 : vector<8x256xf32>
    %30 = vector.broadcast %3 : f32 to vector<8x256xf32>
    %31 = arith.mulf %27, %30 : vector<8x256xf32>
    %32 = arith.addf %29, %31 : vector<8x256xf32>
    %33 = arith.addf %20, %32 : vector<8x256xf32>
    %34 = vector.broadcast %8 : f32 to vector<8x256xf32>
    %35 = arith.mulf %26, %34 : vector<8x256xf32>
    %36 = vector.broadcast %9 : f32 to vector<8x256xf32>
    %37 = arith.mulf %27, %36 : vector<8x256xf32>
    %38 = arith.addf %35, %37 : vector<8x256xf32>
    %39 = arith.addf %25, %38 : vector<8x256xf32>
    %c0_7 = arith.constant 0 : index
    %c1024 = arith.constant 1024 : index
    %40 = vector.load %arg1[%c0_7, %c1024] : memref<8x1536xf32, #tpu.memory_space<vmem>>, vector<8x256xf32>
    %c0_8 = arith.constant 0 : index
    %c1280 = arith.constant 1280 : index
    %41 = vector.load %arg1[%c0_8, %c1280] : memref<8x1536xf32, #tpu.memory_space<vmem>>, vector<8x256xf32>
    %42 = vector.broadcast %4 : f32 to vector<8x256xf32>
    %43 = arith.mulf %40, %42 : vector<8x256xf32>
    %44 = vector.broadcast %5 : f32 to vector<8x256xf32>
    %45 = arith.mulf %41, %44 : vector<8x256xf32>
    %46 = arith.addf %43, %45 : vector<8x256xf32>
    %47 = arith.addf %33, %46 : vector<8x256xf32>
    %48 = vector.broadcast %10 : f32 to vector<8x256xf32>
    %49 = arith.mulf %40, %48 : vector<8x256xf32>
    %50 = vector.broadcast %11 : f32 to vector<8x256xf32>
    %51 = arith.mulf %41, %50 : vector<8x256xf32>
    %52 = arith.addf %49, %51 : vector<8x256xf32>
    %53 = arith.addf %39, %52 : vector<8x256xf32>
    %54 = vector.broadcast %12 : f32 to vector<8x256xf32>
    %55 = arith.addf %47, %54 : vector<8x256xf32>
    %c0_9 = arith.constant 0 : index
    %c0_10 = arith.constant 0 : index
    %56 = vector.load %arg4[%c0_9, %c0_10] : memref<8x512xf32, #tpu.memory_space<vmem>>, vector<8x256xf32>
    tpu.vector_store %arg4[%c0_9, %c0_10], %55 {strides = array<i32>} : memref<8x512xf32, #tpu.memory_space<vmem>>, vector<8x256xf32>,
    %57 = vector.broadcast %13 : f32 to vector<8x256xf32>
    %58 = arith.addf %53, %57 : vector<8x256xf32>
    %c0_11 = arith.constant 0 : index
    %c256_12 = arith.constant 256 : index
    %59 = vector.load %arg4[%c0_11, %c256_12] : memref<8x512xf32, #tpu.memory_space<vmem>>, vector<8x256xf32>
    tpu.vector_store %arg4[%c0_11, %c256_12], %58 {strides = array<i32>} : memref<8x512xf32, #tpu.memory_space<vmem>>, vector<8x256xf32>,
    return
  }
  func.func @transform_0(%arg0: i32) -> (i32, i32) {
    %c0_i32 = arith.constant 0 : i32
    %c0_i32_0 = arith.constant 0 : i32
    return %arg0, %c0_i32 : i32, i32
  }
  func.func @transform_1(%arg0: i32) -> i32 {
    %c0_i32 = arith.constant 0 : i32
    %c0_i32_0 = arith.constant 0 : i32
    return %c0_i32 : i32
  }
  func.func @transform_2(%arg0: i32) -> i32 {
    %c0_i32 = arith.constant 0 : i32
    %c0_i32_0 = arith.constant 0 : i32
    return %c0_i32 : i32
  }
  func.func @transform_3(%arg0: i32) -> (i32, i32) {
    %c0_i32 = arith.constant 0 : i32
    %c0_i32_0 = arith.constant 0 : i32
    return %arg0, %c0_i32 : i32, i32
  }
}

</mosaic_0001>

<llo_original>
// kernel: tpu_custom_call.1
$region0: #{tpu_custom_call.1}
  #allocation0 [shape = 'u32[]', space=smem, size = 0x4, offset = 0x4, fixed_abs, tag = 'smem constant byte address 0x4 - core index']
  #allocation1 [shape = 'u32[144,128]{1,0:T(1,128)}', space=vmem, size = 0x12000, scoped, tag = 'internal scratch']
  %s0 = inlined_call_operand.hbm [shape: f32[8,1536], index: 0, kind: input, shape index: {}]
  %s1 = inlined_call_operand.vmem [shape: f32[12], index: 1, kind: input, shape index: {}]
  %s2 = inlined_call_operand.vmem [shape: f32[2], index: 2, kind: input, shape index: {}]
  %s3 = inlined_call_operand.hbm [shape: f32[8,512], index: 3, kind: output, shape index: {}]
  %s4 = sld [smem:[#allocation0]]
  $region34: #{tpu_custom_call.1} parent=0
    _
  %s6 = ssub.s32 1, %s4
  %s7 = scalar_select 0, %s6, %s4
  $region1: #{tpu_custom_call.1} parent=0
    #allocation2 [shape = 'u8[49152]{0}', space=vmem, size = 0xc000, scoped, tag = 'input window, operand 0, single buffered']
    #allocation3 [shape = 's32[1]{0}', space=sflag, size = 0x4, scoped, tag = 'scoped memory for tpu_custom_call.1']
    #allocation4 [shape = 's32[1]{0}', space=sflag, size = 0x4, scoped, tag = 'scoped memory for tpu_custom_call.1']
    #allocation5 [shape = 's32[1]{0}', space=sflag, size = 0x4, scoped, tag = 'scoped memory for tpu_custom_call.1']
    #allocation6 [shape = 'u8[512]{0}', space=smem, size = 0x200, scoped, tag = 'input window, operand 1, single buffered']
    #allocation7 [shape = 'u8[512]{0}', space=smem, size = 0x200, scoped, tag = 'input window, operand 2, single buffered']
    #allocation8 [shape = 's32[1]{0}', space=sflag, size = 0x4, scoped, tag = 'scoped memory for tpu_custom_call.1']
    #allocation9 [shape = 'u8[16384]{0}', space=vmem, size = 0x4000, scoped, tag = 'output window, operand 0, single buffered']
    %8 = vsyncpa [#allocation3], 0
    %9 = vsyncpa [#allocation5], 0
    %10 = vsyncpa [#allocation8], 0
    %11 = vsyncpa [#allocation4], 0
    // Predicated region
    $region2: #{tpu_custom_call.1} parent=1 // pred_check
      _
    $region3: #{tpu_custom_call.1} parent=1 // pred_check_branch
      %13 = sbr.rel (0) target = $region5
    $region4: #{tpu_custom_call.1} parent=1 // pred_region
      %s15 = ssub.s32 1536, 1536
      %16 = vsyncadd [#allocation3], %s15
      %s18 = sshll.u32 [#allocation2], 4
      %s19 = int_to_ptr.vmem [resolvable:$true] %s18
      %21 = dma.hbm_to_vmem [thread:$0]  %s0, 1536, %s19, [#allocation3]
    $region5: #{tpu_custom_call.1} parent=1 // pred_fallthru
      _
    // Predicated region
    $region6: #{tpu_custom_call.1} parent=1 // pred_check
      _
    $region7: #{tpu_custom_call.1} parent=1 // pred_check_branch
      %23 = sbr.rel (0) target = $region9
    $region8: #{tpu_custom_call.1} parent=1 // pred_region
      %s25 = ssub.s32 16, 16
      %26 = vsyncadd [#allocation5], %s25
      %s28 = sshll.u32 %s1, 4
      %s29 = int_to_ptr.vmem [resolvable:$true] %s28
      %31 = dma.vmem_to_smem %s29, 16, [#allocation6], [#allocation5]
    $region9: #{tpu_custom_call.1} parent=1 // pred_fallthru
      _
    // Predicated region
    $region10: #{tpu_custom_call.1} parent=1 // pred_check
      _
    $region11: #{tpu_custom_call.1} parent=1 // pred_check_branch
      %33 = sbr.rel (0) target = $region13
    $region12: #{tpu_custom_call.1} parent=1 // pred_region
      %s35 = ssub.s32 16, 16
      %36 = vsyncadd [#allocation8], %s35
      %s38 = sshll.u32 %s2, 4
      %s39 = int_to_ptr.vmem [resolvable:$true] %s38
      %41 = dma.vmem_to_smem %s39, 16, [#allocation7], [#allocation8]
    $region13: #{tpu_custom_call.1} parent=1 // pred_fallthru
      _
    // Predicated region
    $region14: #{tpu_custom_call.1} parent=1 // pred_check
      _
    $region15: #{tpu_custom_call.1} parent=1 // pred_check_branch
      %43 = sbr.rel (0) target = $region17
    $region16: #{tpu_custom_call.1} parent=1 // pred_region
      %44 = dma.done [#allocation3], 1536
    $region17: #{tpu_custom_call.1} parent=1 // pred_fallthru
      _
    // Predicated region
    $region18: #{tpu_custom_call.1} parent=1 // pred_check
      _
    $region19: #{tpu_custom_call.1} parent=1 // pred_check_branch
      %46 = sbr.rel (0) target = $region21
    $region20: #{tpu_custom_call.1} parent=1 // pred_region
      %47 = dma.done [#allocation5], 16
    $region21: #{tpu_custom_call.1} parent=1 // pred_fallthru
      _
    // Predicated region
    $region22: #{tpu_custom_call.1} parent=1 // pred_check
      _
    $region23: #{tpu_custom_call.1} parent=1 // pred_check_branch
      %49 = sbr.rel (0) target = $region25
    $region24: #{tpu_custom_call.1} parent=1 // pred_region
      %50 = dma.done [#allocation8], 16
    $region25: #{tpu_custom_call.1} parent=1 // pred_fallthru
      _
    %51 = sfence
    %s52 = sld [smem:[#allocation6]]
    %s53 = sld [smem:[#allocation6 + $0x1]]
    %s54 = sld [smem:[#allocation6 + $0x2]]
    %s55 = sld [smem:[#allocation6 + $0x3]]
    %s56 = sld [smem:[#allocation6 + $0x4]]
    %s57 = sld [smem:[#allocation6 + $0x5]]
    %s58 = sld [smem:[#allocation6 + $0x6]]
    %s59 = sld [smem:[#allocation6 + $0x7]]
    %s60 = sld [smem:[#allocation6 + $0x8]]
    %s61 = sld [smem:[#allocation6 + $0x9]]
    %s62 = sld [smem:[#allocation6 + $0xa]]
    %s63 = sld [smem:[#allocation6 + $0xb]]
    %s64 = sld [smem:[#allocation7]]
    %s65 = sld [smem:[#allocation7 + $0x1]]
    %v66 = vld [vmem:[#allocation2] sm:$0xff]
    %v67 = vld [vmem:[#allocation2 + $0x8] sm:$0xff]
    %v68 = vld [vmem:[#allocation2 + $0x10] sm:$0xff]
    %v69 = vld [vmem:[#allocation2 + $0x18] sm:$0xff]
    %v70 = vstv %s52
    %v71 = vmul.f32 %v66, %v70
    %v72 = vmul.f32 %v67, %v70
    %v73 = vstv %s53
    %v74 = vmul.f32 %v68, %v73
    %v75 = vmul.f32 %v69, %v73
    %v76 = vadd.f32 %v71, %v74
    %v77 = vadd.f32 %v72, %v75
    %v78 = vstv %s58
    %v79 = vmul.f32 %v66, %v78
    %v80 = vmul.f32 %v67, %v78
    %v81 = vstv %s59
    %v82 = vmul.f32 %v68, %v81
    %v83 = vmul.f32 %v69, %v81
    %v84 = vadd.f32 %v79, %v82
    %v85 = vadd.f32 %v80, %v83
    %v86 = vld [vmem:[#allocation2 + $0x20] sm:$0xff]
    %v87 = vld [vmem:[#allocation2 + $0x28] sm:$0xff]
    %v88 = vld [vmem:[#allocation2 + $0x30] sm:$0xff]
    %v89 = vld [vmem:[#allocation2 + $0x38] sm:$0xff]
    %v90 = vstv %s54
    %v91 = vmul.f32 %v86, %v90
    %v92 = vmul.f32 %v87, %v90
    %v93 = vstv %s55
    %v94 = vmul.f32 %v88, %v93
    %v95 = vmul.f32 %v89, %v93
    %v96 = vadd.f32 %v91, %v94
    %v97 = vadd.f32 %v92, %v95
    %v98 = vadd.f32 %v76, %v96
    %v99 = vadd.f32 %v77, %v97
    %v100 = vstv %s60
    %v101 = vmul.f32 %v86, %v100
    %v102 = vmul.f32 %v87, %v100
    %v103 = vstv %s61
    %v104 = vmul.f32 %v88, %v103
    %v105 = vmul.f32 %v89, %v103
    %v106 = vadd.f32 %v101, %v104
    %v107 = vadd.f32 %v102, %v105
    %v108 = vadd.f32 %v84, %v106
    %v109 = vadd.f32 %v85, %v107
    %v110 = vld [vmem:[#allocation2 + $0x40] sm:$0xff]
    %v111 = vld [vmem:[#allocation2 + $0x48] sm:$0xff]
    %v112 = vld [vmem:[#allocation2 + $0x50] sm:$0xff]
    %v113 = vld [vmem:[#allocation2 + $0x58] sm:$0xff]
    %v114 = vstv %s56
    %v115 = vmul.f32 %v110, %v114
    %v116 = vmul.f32 %v111, %v114
    %v117 = vstv %s57
    %v118 = vmul.f32 %v112, %v117
    %v119 = vmul.f32 %v113, %v117
    %v120 = vadd.f32 %v115, %v118
    %v121 = vadd.f32 %v116, %v119
    %v122 = vadd.f32 %v98, %v120
    %v123 = vadd.f32 %v99, %v121
    %v124 = vstv %s62
    %v125 = vmul.f32 %v110, %v124
    %v126 = vmul.f32 %v111, %v124
    %v127 = vstv %s63
    %v128 = vmul.f32 %v112, %v127
    %v129 = vmul.f32 %v113, %v127
    %v130 = vadd.f32 %v125, %v128
    %v131 = vadd.f32 %v126, %v129
    %v132 = vadd.f32 %v108, %v130
    %v133 = vadd.f32 %v109, %v131
    %v134 = vstv %s64
    %v135 = vadd.f32 %v122, %v134
    %v136 = vadd.f32 %v123, %v134
    %137 = vst [vmem:[#allocation9] sm:$0xff] %v135
    %138 = vst [vmem:[#allocation9 + $0x8] sm:$0xff] %v136
    %v139 = vstv %s65
    %v140 = vadd.f32 %v132, %v139
    %v141 = vadd.f32 %v133, %v139
    %142 = vst [vmem:[#allocation9 + $0x10] sm:$0xff] %v140
    %143 = vst [vmem:[#allocation9 + $0x18] sm:$0xff] %v141
    // Predicated region
    $region26: #{tpu_custom_call.1} parent=1 // pred_check
      _
    $region27: #{tpu_custom_call.1} parent=1 // pred_check_branch
      %145 = sbr.rel (0) target = $region29
    $region28: #{tpu_custom_call.1} parent=1 // pred_region
      %s147 = ssub.s32 512, 512
      %148 = vsyncadd [#allocation4], %s147
      %s150 = sshll.u32 [#allocation9], 4
      %s151 = int_to_ptr.vmem [resolvable:$true] %s150
      %153 = dma.vmem_to_hbm [thread:$0]  %s151, 512, %s3, [#allocation4]
    $region29: #{tpu_custom_call.1} parent=1 // pred_fallthru
      _
    // Predicated region
    $region30: #{tpu_custom_call.1} parent=1 // pred_check
      _
    $region31: #{tpu_custom_call.1} parent=1 // pred_check_branch
      %155 = sbr.rel (0) target = $region33
    $region32: #{tpu_custom_call.1} parent=1 // pred_region
      %156 = dma.done [#allocation4], 512
    $region33: #{tpu_custom_call.1} parent=1 // pred_fallthru
      _
    %157 = vsyncpa [#allocation3], 1
    %158 = vsyncpa [#allocation4], 1
    %159 = vsyncpa [#allocation5], 1
    %160 = vsyncpa [#allocation8], 1

</llo_original>
